<compile_context>
chip_gen: v6e
topology: v6e:2x2x1
jax: 0.10.0
libtpu: 0.0.40
codegen_flags: <defaults>
</compile_context>

<pallas_src>
import jax
import jax.numpy as jnp
from jax.experimental import pallas as pl
from jax.experimental.pallas import tpu as pltpu

IN_DIM = 121 * 6          # 726
H1 = 64
H2 = 11
OUT = 4

MAX_TB = 4096             # x tile @ f32 = ~11.9 MiB; double-buffered ~24 MiB


def _round_up(x, m):
    return ((x + m - 1) // m) * m


def mlp_kernel(x_ref, w1_ref, b1_ref, w2_ref, b2_ref, w3_ref, b3_ref, o_ref):
    # fc1 + relu (f32 accumulation on the MXU)
    h1 = jnp.dot(x_ref[...], w1_ref[...], preferred_element_type=jnp.float32)
    h1 = jnp.maximum(h1 + b1_ref[...], 0.0)
    # fc2 + relu (tiny, VMEM-resident weights; MXU shape inefficiency is irrelevant here)
    h2 = jnp.dot(h1, w2_ref[...], preferred_element_type=jnp.float32)
    h2 = jnp.maximum(h2 + b2_ref[...], 0.0)
    # fc3 (no activation)
    y = jnp.dot(h2, w3_ref[...], preferred_element_type=jnp.float32) + b3_ref[...]
    o_ref[...] = y.astype(o_ref.dtype)


def _choose_tile(B):
    """Pick a batch tile (multiple of 8 where possible) and make >=2 balanced tiles
    once B >= 16 so v7x's second TensorCore gets work."""
    if B < 8:
        return B                                   # block dim == full array dim (legal)
    if _round_up(B, 8) < 16:
        return 8
    n = max(2, pl.cdiv(B, MAX_TB))
    return min(MAX_TB, _round_up(pl.cdiv(B, n), 8))


@jax.jit
def nn_model_1o_forward(x, w1, b1, w2, b2, w3, b3):
    """x: (B, 726) float32 -> (B, 4) float32.

    Weights are stored as (in_features, out_features), i.e. y = x @ W + b
    (equivalent to PyTorch's x @ W_pt.T + b).
    """
    B = x.shape[0]
    TB = _choose_tile(B)
    n_tiles = pl.cdiv(B, TB)

    x_f = x.astype(jnp.float32)
    w1_f = w1.astype(jnp.float32)
    b1_2d = b1.reshape(1, H1).astype(jnp.float32)
    w2_f = w2.astype(jnp.float32)
    b2_2d = b2.reshape(1, H2).astype(jnp.float32)
    w3_f = w3.astype(jnp.float32)
    b3_2d = b3.reshape(1, OUT).astype(jnp.float32)

    const = lambda shape: pl.BlockSpec(shape, lambda i: tuple(0 for _ in shape))

    # Honest scheduling hints (f32 x in, 4-wide f32 out, weights read once).
    n_wparams = IN_DIM * H1 + H1 * H2 + H2 * OUT + H1 + H2 + OUT
    flops = 2 * B * (IN_DIM * H1 + H1 * H2 + H2 * OUT)
    bytes_accessed = B * IN_DIM * 4 + n_wparams * 4 + B * OUT * 4

    # VMEM budget: double-buffered x tile + double-buffered out tile + resident weights.
    vmem_needed = 2 * TB * IN_DIM * 4 + 2 * TB * OUT * 4 + n_wparams * 4
    vmem_limit = min(max(32 << 20, vmem_needed + (8 << 20)), 48 << 20)

    out = pl.pallas_call(
        mlp_kernel,
        out_shape=jax.ShapeDtypeStruct((B, OUT), jnp.float32),
        grid_spec=pltpu.PrefetchScalarGridSpec(
            num_scalar_prefetch=0,
            grid=(n_tiles,),
            in_specs=[
                pl.BlockSpec((TB, IN_DIM), lambda i: (i, 0)),   # x: streamed per batch tile
                const((IN_DIM, H1)),                            # w1: VMEM-resident
                const((1, H1)),                                 # b1
                const((H1, H2)),                                # w2
                const((1, H2)),                                 # b2
                const((H2, OUT)),                               # w3
                const((1, OUT)),                                # b3
            ],
            out_specs=pl.BlockSpec((TB, OUT), lambda i: (i, 0)),
        ),
        compiler_params=pltpu.CompilerParams(
            dimension_semantics=("parallel",),                  # shard batch tiles across TCs
            vmem_limit_bytes=vmem_limit,                        # keep big tiles legal on v5e
        ),
        cost_estimate=pl.CostEstimate(
            flops=flops, transcendentals=0, bytes_accessed=bytes_accessed
        ),
    )(x_f, w1_f, b1_2d, w2_f, b2_2d, w3_f, b3_2d)

    return out


def init_params(key):
    """Deterministic init matching PyTorch Linear shapes (stored transposed)."""
    ks = jax.random.split(key, 6)

    def linear(kw, kb, fan_in, fan_out):
        bound = 1.0 / jnp.sqrt(fan_in)
        # stored as (in, out) for y = x @ W
        w = jax.random.uniform(kw, (fan_in, fan_out), jnp.float32, -bound, bound)
        b = jax.random.uniform(kb, (fan_out,), jnp.float32, -bound, bound)
        return w, b

    w1, b1 = linear(ks[0], ks[1], IN_DIM, H1)
    w2, b2 = linear(ks[2], ks[3], H1, H2)
    w3, b3 = linear(ks[4], ks[5], H2, OUT)
    return w1, b1, w2, b2, w3, b3


if __name__ == "__main__":
    key = jax.random.PRNGKey(0)
    k_x, k_p = jax.random.split(key)

    B = 8
    x = jax.random.normal(k_x, (B, IN_DIM), jnp.float32)
    w1, b1, w2, b2, w3, b3 = init_params(k_p)

    out = nn_model_1o_forward(x, w1, b1, w2, b2, w3, b3)
    out = jax.block_until_ready(out)

    # reference check in plain JAX (f32)
    ref = jnp.maximum(x @ w1 + b1, 0.0)
    ref = jnp.maximum(ref @ w2 + b2, 0.0)
    ref = ref @ w3 + b3
    assert out.shape == (B, OUT)
    assert jnp.allclose(out, ref, atol=1e-2, rtol=1e-2), jnp.max(jnp.abs(out - ref))

    print("KERNEL_OK")
</pallas_src>

<mosaic_0001>
module attributes {stable_mosaic.version = 11 : i64} {
  func.func @mlp_kernel(%arg0: i32, %arg1: memref<8x726xf32, #tpu.memory_space<vmem>>, %arg2: memref<726x64xf32, #tpu.memory_space<vmem>>, %arg3: memref<1x64xf32, #tpu.memory_space<vmem>>, %arg4: memref<64x11xf32, #tpu.memory_space<vmem>>, %arg5: memref<1x11xf32, #tpu.memory_space<vmem>>, %arg6: memref<11x4xf32, #tpu.memory_space<vmem>>, %arg7: memref<1x4xf32, #tpu.memory_space<vmem>>, %arg8: memref<8x4xf32, #tpu.memory_space<vmem>>) attributes {dimension_semantics = [#tpu.dimension_semantics<parallel>], iteration_bounds = array<i64: 1>, scalar_prefetch = 0 : i64, scratch_operands = 0 : i64, tpu.core_type = #tpu.core_type<tc>, window_params = [{transform_indices = @transform_0, window_bounds = array<i64: 8, 726>}, {pipeline_mode = #tpu.pipeline_mode<synchronous>, transform_indices = @transform_1, window_bounds = array<i64: 726, 64>}, {pipeline_mode = #tpu.pipeline_mode<synchronous>, transform_indices = @transform_2, window_bounds = array<i64: 1, 64>}, {pipeline_mode = #tpu.pipeline_mode<synchronous>, transform_indices = @transform_3, window_bounds = array<i64: 64, 11>}, {pipeline_mode = #tpu.pipeline_mode<synchronous>, transform_indices = @transform_4, window_bounds = array<i64: 1, 11>}, {pipeline_mode = #tpu.pipeline_mode<synchronous>, transform_indices = @transform_5, window_bounds = array<i64: 11, 4>}, {pipeline_mode = #tpu.pipeline_mode<synchronous>, transform_indices = @transform_6, window_bounds = array<i64: 1, 4>}, {transform_indices = @transform_7, window_bounds = array<i64: 8, 4>}]} {
    %c0 = arith.constant 0 : index
    %c0_0 = arith.constant 0 : index
    %0 = vector.load %arg1[%c0, %c0_0] : memref<8x726xf32, #tpu.memory_space<vmem>>, vector<8x726xf32>
    %c0_1 = arith.constant 0 : index
    %c0_2 = arith.constant 0 : index
    %1 = vector.load %arg2[%c0_1, %c0_2] : memref<726x64xf32, #tpu.memory_space<vmem>>, vector<726x64xf32>
    %cst = arith.constant dense<0.000000e+00> : vector<8x64xf32>
    %2 = tpu.matmul %0, %1, %cst {dimension_numbers = #tpu.dot_dimension_numbers<[1], [0], [0], [1], [0, 0, 1, 1], [], []>} : vector<8x726xf32>, vector<726x64xf32>, vector<8x64xf32> -> vector<8x64xf32>
    %c0_3 = arith.constant 0 : index
    %c0_4 = arith.constant 0 : index
    %3 = vector.load %arg3[%c0_3, %c0_4] : memref<1x64xf32, #tpu.memory_space<vmem>>, vector<1x64xf32>
    %4 = vector.broadcast %3 : vector<1x64xf32> to vector<8x64xf32>
    %5 = arith.addf %2, %4 : vector<8x64xf32>
    %cst_5 = arith.constant 0.000000e+00 : f32
    %6 = vector.broadcast %cst_5 : f32 to vector<8x64xf32>
    %7 = arith.maximumf %5, %6 : vector<8x64xf32>
    %c0_6 = arith.constant 0 : index
    %c0_7 = arith.constant 0 : index
    %8 = vector.load %arg4[%c0_6, %c0_7] : memref<64x11xf32, #tpu.memory_space<vmem>>, vector<64x11xf32>
    %cst_8 = arith.constant dense<0.000000e+00> : vector<8x11xf32>
    %9 = tpu.matmul %7, %8, %cst_8 {dimension_numbers = #tpu.dot_dimension_numbers<[1], [0], [0], [1], [0, 0, 1, 1], [], []>} : vector<8x64xf32>, vector<64x11xf32>, vector<8x11xf32> -> vector<8x11xf32>
    %c0_9 = arith.constant 0 : index
    %c0_10 = arith.constant 0 : index
    %10 = vector.load %arg5[%c0_9, %c0_10] : memref<1x11xf32, #tpu.memory_space<vmem>>, vector<1x11xf32>
    %11 = vector.broadcast %10 : vector<1x11xf32> to vector<8x11xf32>
    %12 = arith.addf %9, %11 : vector<8x11xf32>
    %cst_11 = arith.constant 0.000000e+00 : f32
    %13 = vector.broadcast %cst_11 : f32 to vector<8x11xf32>
    %14 = arith.maximumf %12, %13 : vector<8x11xf32>
    %c0_12 = arith.constant 0 : index
    %c0_13 = arith.constant 0 : index
    %15 = vector.load %arg6[%c0_12, %c0_13] : memref<11x4xf32, #tpu.memory_space<vmem>>, vector<11x4xf32>
    %cst_14 = arith.constant dense<0.000000e+00> : vector<8x4xf32>
    %16 = tpu.matmul %14, %15, %cst_14 {dimension_numbers = #tpu.dot_dimension_numbers<[1], [0], [0], [1], [0, 0, 1, 1], [], []>} : vector<8x11xf32>, vector<11x4xf32>, vector<8x4xf32> -> vector<8x4xf32>
    %c0_15 = arith.constant 0 : index
    %c0_16 = arith.constant 0 : index
    %17 = vector.load %arg7[%c0_15, %c0_16] : memref<1x4xf32, #tpu.memory_space<vmem>>, vector<1x4xf32>
    %18 = vector.broadcast %17 : vector<1x4xf32> to vector<8x4xf32>
    %19 = arith.addf %16, %18 : vector<8x4xf32>
    %c0_17 = arith.constant 0 : index
    %c0_18 = arith.constant 0 : index
    %20 = vector.load %arg8[%c0_17, %c0_18] : memref<8x4xf32, #tpu.memory_space<vmem>>, vector<8x4xf32>
    tpu.vector_store %arg8[%c0_17, %c0_18], %19 {strides = array<i32>} : memref<8x4xf32, #tpu.memory_space<vmem>>, vector<8x4xf32>,
    return
  }
  func.func @transform_0(%arg0: i32) -> (i32, i32) {
    %c0_i32 = arith.constant 0 : i32
    %c0_i32_0 = arith.constant 0 : i32
    return %arg0, %c0_i32 : i32, i32
  }
  func.func @transform_1(%arg0: i32) -> (i32, i32) {
    %c0_i32 = arith.constant 0 : i32
    %c0_i32_0 = arith.constant 0 : i32
    %c0_i32_1 = arith.constant 0 : i32
    return %c0_i32, %c0_i32_0 : i32, i32
  }
  func.func @transform_2(%arg0: i32) -> (i32, i32) {
    %c0_i32 = arith.constant 0 : i32
    %c0_i32_0 = arith.constant 0 : i32
    %c0_i32_1 = arith.constant 0 : i32
    return %c0_i32, %c0_i32_0 : i32, i32
  }
  func.func @transform_3(%arg0: i32) -> (i32, i32) {
    %c0_i32 = arith.constant 0 : i32
    %c0_i32_0 = arith.constant 0 : i32
    %c0_i32_1 = arith.constant 0 : i32
    return %c0_i32, %c0_i32_0 : i32, i32
  }
  func.func @transform_4(%arg0: i32) -> (i32, i32) {
    %c0_i32 = arith.constant 0 : i32
    %c0_i32_0 = arith.constant 0 : i32
    %c0_i32_1 = arith.constant 0 : i32
    return %c0_i32, %c0_i32_0 : i32, i32
  }
  func.func @transform_5(%arg0: i32) -> (i32, i32) {
    %c0_i32 = arith.constant 0 : i32
    %c0_i32_0 = arith.constant 0 : i32
    %c0_i32_1 = arith.constant 0 : i32
    return %c0_i32, %c0_i32_0 : i32, i32
  }
  func.func @transform_6(%arg0: i32) -> (i32, i32) {
    %c0_i32 = arith.constant 0 : i32
    %c0_i32_0 = arith.constant 0 : i32
    %c0_i32_1 = arith.constant 0 : i32
    return %c0_i32, %c0_i32_0 : i32, i32
  }
  func.func @transform_7(%arg0: i32) -> (i32, i32) {
    %c0_i32 = arith.constant 0 : i32
    %c0_i32_0 = arith.constant 0 : i32
    return %arg0, %c0_i32 : i32, i32
  }
}

</mosaic_0001>

<llo_original>
// kernel: nn_model_1o_forward.1
$region0: #{nn_model_1o_forward.1}
  #allocation0 [shape = 'u32[]', space=smem, size = 0x4, offset = 0x4, fixed_abs, tag = 'smem constant byte address 0x4 - core index']
  #allocation1 [shape = 'u32[144,128]{1,0:T(1,128)}', space=vmem, size = 0x12000, scoped, tag = 'internal scratch']
  %s0 = inlined_call_operand.vmem [shape: f32[8,726], index: 0, kind: input, shape index: {}]
  %s1 = inlined_call_operand.vmem [shape: f32[726,64], index: 1, kind: input, shape index: {}]
  %s2 = inlined_call_operand.vmem [shape: f32[1,64], index: 2, kind: input, shape index: {}]
  %s3 = inlined_call_operand.vmem [shape: f32[64,11], index: 3, kind: input, shape index: {}]
  %s4 = inlined_call_operand.vmem [shape: f32[1,11], index: 4, kind: input, shape index: {}]
  %s5 = inlined_call_operand.vmem [shape: f32[11,4], index: 5, kind: input, shape index: {}]
  %s6 = inlined_call_operand.vmem [shape: f32[1,4], index: 6, kind: input, shape index: {}]
  %s7 = inlined_call_operand.vmem [shape: f32[8,4], index: 7, kind: output, shape index: {}]
  %s8 = sld [smem:[#allocation0]]
  $region38: #{nn_model_1o_forward.1} parent=0
    _
  %s10 = ssub.s32 1, %s8
  %s11 = scalar_select 0, %s10, %s8
  // Predicated region
  $region2: #{nn_model_1o_forward.1} parent=0 // pred_check
    _
  $region3: #{nn_model_1o_forward.1} parent=0 // pred_check_branch
    %13 = sbr.rel (0) target = $region5
  $region4: #{nn_model_1o_forward.1} parent=0 // pred_region
    _
  $region5: #{nn_model_1o_forward.1} parent=0 // pred_fallthru
    _
  // Predicated region
  $region6: #{nn_model_1o_forward.1} parent=0 // pred_check
    _
  $region7: #{nn_model_1o_forward.1} parent=0 // pred_check_branch
    %15 = sbr.rel (0) target = $region9
  $region8: #{nn_model_1o_forward.1} parent=0 // pred_region
    _
  $region9: #{nn_model_1o_forward.1} parent=0 // pred_fallthru
    _
  // Predicated region
  $region10: #{nn_model_1o_forward.1} parent=0 // pred_check
    _
  $region11: #{nn_model_1o_forward.1} parent=0 // pred_check_branch
    %17 = sbr.rel (0) target = $region13
  $region12: #{nn_model_1o_forward.1} parent=0 // pred_region
    _
  $region13: #{nn_model_1o_forward.1} parent=0 // pred_fallthru
    _
  // Predicated region
  $region14: #{nn_model_1o_forward.1} parent=0 // pred_check
    _
  $region15: #{nn_model_1o_forward.1} parent=0 // pred_check_branch
    %19 = sbr.rel (0) target = $region17
  $region16: #{nn_model_1o_forward.1} parent=0 // pred_region
    _
  $region17: #{nn_model_1o_forward.1} parent=0 // pred_fallthru
    _
  // Predicated region
  $region18: #{nn_model_1o_forward.1} parent=0 // pred_check
    _
  $region19: #{nn_model_1o_forward.1} parent=0 // pred_check_branch
    %21 = sbr.rel (0) target = $region21
  $region20: #{nn_model_1o_forward.1} parent=0 // pred_region
    _
  $region21: #{nn_model_1o_forward.1} parent=0 // pred_fallthru
    _
  // Predicated region
  $region22: #{nn_model_1o_forward.1} parent=0 // pred_check
    _
  $region23: #{nn_model_1o_forward.1} parent=0 // pred_check_branch
    %23 = sbr.rel (0) target = $region25
  $region24: #{nn_model_1o_forward.1} parent=0 // pred_region
    _
  $region25: #{nn_model_1o_forward.1} parent=0 // pred_fallthru
    _
  // Predicated region
  $region26: #{nn_model_1o_forward.1} parent=0 // pred_check
    _
  $region27: #{nn_model_1o_forward.1} parent=0 // pred_check_branch
    %25 = sbr.rel (0) target = $region29
  $region28: #{nn_model_1o_forward.1} parent=0 // pred_region
    _
  $region29: #{nn_model_1o_forward.1} parent=0 // pred_fallthru
    _
  %v26 = vld [vmem:[%s0] sm:$0xff]
  %v27 = vld [vmem:[%s0 + $0x8] sm:$0xff]
  %v28 = vld [vmem:[%s0 + $0x10] sm:$0xff]
  %v29 = vld [vmem:[%s0 + $0x18] sm:$0xff]
  %v30 = vld [vmem:[%s0 + $0x20] sm:$0xff]
  %v31 = vld [vmem:[%s0 + $0x28] sm:$0xff]
  %v32 = vld [vmem:[%s1] sm:$0xff]
  %v33 = vld [vmem:[%s1 + $0x8] sm:$0xff]
  %v34 = vld [vmem:[%s1 + $0x10] sm:$0xff]
  %v35 = vld [vmem:[%s1 + $0x18] sm:$0xff]
  %v36 = vld [vmem:[%s1 + $0x20] sm:$0xff]
  %v37 = vld [vmem:[%s1 + $0x28] sm:$0xff]
  %v38 = vld [vmem:[%s1 + $0x30] sm:$0xff]
  %v39 = vld [vmem:[%s1 + $0x38] sm:$0xff]
  %v40 = vld [vmem:[%s1 + $0x40] sm:$0xff]
  %v41 = vld [vmem:[%s1 + $0x48] sm:$0xff]
  %v42 = vld [vmem:[%s1 + $0x50] sm:$0xff]
  %v43 = vld [vmem:[%s1 + $0x58] sm:$0xff]
  %v44 = vld [vmem:[%s1 + $0x60] sm:$0xff]
  %v45 = vld [vmem:[%s1 + $0x68] sm:$0xff]
  %v46 = vld [vmem:[%s1 + $0x70] sm:$0xff]
  %v47 = vld [vmem:[%s1 + $0x78] sm:$0xff]
  %v48 = vld [vmem:[%s1 + $0x80] sm:$0xff]
  %v49 = vld [vmem:[%s1 + $0x88] sm:$0xff]
  %v50 = vld [vmem:[%s1 + $0x90] sm:$0xff]
  %v51 = vld [vmem:[%s1 + $0x98] sm:$0xff]
  %v52 = vld [vmem:[%s1 + $0xa0] sm:$0xff]
  %v53 = vld [vmem:[%s1 + $0xa8] sm:$0xff]
  %v54 = vld [vmem:[%s1 + $0xb0] sm:$0xff]
  %v55 = vld [vmem:[%s1 + $0xb8] sm:$0xff]
  %v56 = vld [vmem:[%s1 + $0xc0] sm:$0xff]
  %v57 = vld [vmem:[%s1 + $0xc8] sm:$0xff]
  %v58 = vld [vmem:[%s1 + $0xd0] sm:$0xff]
  %v59 = vld [vmem:[%s1 + $0xd8] sm:$0xff]
  %v60 = vld [vmem:[%s1 + $0xe0] sm:$0xff]
  %v61 = vld [vmem:[%s1 + $0xe8] sm:$0xff]
  %v62 = vld [vmem:[%s1 + $0xf0] sm:$0xff]
  %v63 = vld [vmem:[%s1 + $0xf8] sm:$0xff]
  %v64 = vld [vmem:[%s1 + $0x100] sm:$0xff]
  %v65 = vld [vmem:[%s1 + $0x108] sm:$0xff]
  %v66 = vld [vmem:[%s1 + $0x110] sm:$0xff]
  %v67 = vld [vmem:[%s1 + $0x118] sm:$0xff]
  %v68 = vld [vmem:[%s1 + $0x120] sm:$0xff]
  %v69 = vld [vmem:[%s1 + $0x128] sm:$0xff]
  %v70 = vld [vmem:[%s1 + $0x130] sm:$0xff]
  %v71 = vld [vmem:[%s1 + $0x138] sm:$0xff]
  %v72 = vld [vmem:[%s1 + $0x140] sm:$0xff]
  %v73 = vld [vmem:[%s1 + $0x148] sm:$0xff]
  %v74 = vld [vmem:[%s1 + $0x150] sm:$0xff]
  %v75 = vld [vmem:[%s1 + $0x158] sm:$0xff]
  %v76 = vld [vmem:[%s1 + $0x160] sm:$0xff]
  %v77 = vld [vmem:[%s1 + $0x168] sm:$0xff]
  %v78 = vld [vmem:[%s1 + $0x170] sm:$0xff]
  %v79 = vld [vmem:[%s1 + $0x178] sm:$0xff]
  %v80 = vld [vmem:[%s1 + $0x180] sm:$0xff]
  %v81 = vld [vmem:[%s1 + $0x188] sm:$0xff]
  %v82 = vld [vmem:[%s1 + $0x190] sm:$0xff]
  %v83 = vld [vmem:[%s1 + $0x198] sm:$0xff]
  %v84 = vld [vmem:[%s1 + $0x1a0] sm:$0xff]
  %v85 = vld [vmem:[%s1 + $0x1a8] sm:$0xff]
  %v86 = vld [vmem:[%s1 + $0x1b0] sm:$0xff]
  %v87 = vld [vmem:[%s1 + $0x1b8] sm:$0xff]
  %v88 = vld [vmem:[%s1 + $0x1c0] sm:$0xff]
  %v89 = vld [vmem:[%s1 + $0x1c8] sm:$0xff]
  %v90 = vld [vmem:[%s1 + $0x1d0] sm:$0xff]
  %v91 = vld [vmem:[%s1 + $0x1d8] sm:$0xff]
  %v92 = vld [vmem:[%s1 + $0x1e0] sm:$0xff]
  %v93 = vld [vmem:[%s1 + $0x1e8] sm:$0xff]
  %v94 = vld [vmem:[%s1 + $0x1f0] sm:$0xff]
  %v95 = vld [vmem:[%s1 + $0x1f8] sm:$0xff]
  %v96 = vld [vmem:[%s1 + $0x200] sm:$0xff]
  %v97 = vld [vmem:[%s1 + $0x208] sm:$0xff]
  %v98 = vld [vmem:[%s1 + $0x210] sm:$0xff]
  %v99 = vld [vmem:[%s1 + $0x218] sm:$0xff]
  %v100 = vld [vmem:[%s1 + $0x220] sm:$0xff]
  %v101 = vld [vmem:[%s1 + $0x228] sm:$0xff]
  %v102 = vld [vmem:[%s1 + $0x230] sm:$0xff]
  %v103 = vld [vmem:[%s1 + $0x238] sm:$0xff]
  %v104 = vld [vmem:[%s1 + $0x240] sm:$0xff]
  %v105 = vld [vmem:[%s1 + $0x248] sm:$0xff]
  %v106 = vld [vmem:[%s1 + $0x250] sm:$0xff]
  %v107 = vld [vmem:[%s1 + $0x258] sm:$0xff]
  %v108 = vld [vmem:[%s1 + $0x260] sm:$0xff]
  %v109 = vld [vmem:[%s1 + $0x268] sm:$0xff]
  %v110 = vld [vmem:[%s1 + $0x270] sm:$0xff]
  %v111 = vld [vmem:[%s1 + $0x278] sm:$0xff]
  %v112 = vld [vmem:[%s1 + $0x280] sm:$0xff]
  %v113 = vld [vmem:[%s1 + $0x288] sm:$0xff]
  %v114 = vld [vmem:[%s1 + $0x290] sm:$0xff]
  %v115 = vld [vmem:[%s1 + $0x298] sm:$0xff]
  %v116 = vld [vmem:[%s1 + $0x2a0] sm:$0xff]
  %v117 = vld [vmem:[%s1 + $0x2a8] sm:$0xff]
  %v118 = vld [vmem:[%s1 + $0x2b0] sm:$0xff]
  %v119 = vld [vmem:[%s1 + $0x2b8] sm:$0xff]
  %v120 = vld [vmem:[%s1 + $0x2c0] sm:$0xff]
  %v121 = vld [vmem:[%s1 + $0x2c8] sm:$0xff]
  %v122 = vld [vmem:[%s1 + $0x2d0] sm:$0x3f]
  %v123 = vld [vmem:[%s2] sm:$0x1]
  %v125 = vlaneseq
  %v126 = vshrl.u32 %v125, 7
  %v127 = vsub.s32 0, %v126
  %v128 = vrot.slane %v123, %v127
  %vm130 = vcmask 703488
  %v132 = vsel %vm130, %v31, 0
  %vm134 = vcmask 1045504
  %v136 = vsel %vm134, %v122, 0
  %138 = vmatprep.subr.mxu0 0.0
  %139 = vmatpush1.msra.mxu0 %v47
  %140 = vmatprep.subr.mxu0 0.0
  %141 = vmatpush1.msra.mxu0 %v46
  %142 = vmatprep.subr.mxu0 0.0
  %143 = vmatpush1.msra.mxu0 %v45
  %144 = vmatprep.subr.mxu0 0.0
  %145 = vmatpush1.msra.mxu0 %v44
  %146 = vmatprep.subr.mxu0 0.0
  %147 = vmatpush1.msra.mxu0 %v43
  %148 = vmatprep.subr.mxu0 0.0
  %149 = vmatpush1.msra.mxu0 %v42
  %150 = vmatprep.subr.mxu0 0.0
  %151 = vmatpush1.msra.mxu0 %v41
  %152 = vmatprep.subr.mxu0 0.0
  %153 = vmatpush1.msra.mxu0 %v40
  %154 = vmatprep.subr.mxu0 0.0
  %155 = vmatpush1.msra.mxu0 %v39
  %156 = vmatprep.subr.mxu0 0.0
  %157 = vmatpush1.msra.mxu0 %v38
  %158 = vmatprep.subr.mxu0 0.0
  %159 = vmatpush1.msra.mxu0 %v37
  %160 = vmatprep.subr.mxu0 0.0
  %161 = vmatpush1.msra.mxu0 %v36
  %162 = vmatprep.subr.mxu0 0.0
  %163 = vmatpush1.msra.mxu0 %v35
  %164 = vmatprep.subr.mxu0 0.0
  %165 = vmatpush1.msra.mxu0 %v34
  %166 = vmatprep.subr.mxu0 0.0
  %167 = vmatpush1.msra.mxu0 %v33
  %168 = vmatprep.subr.mxu0 0.0
  %169 = vmatpush1.msra.mxu0 %v32
  %170 = vmatprep.subr.mxu0 0.0
  %171 = vmatpush2.msra.mxu0 %v63
  %172 = vmatprep.subr.mxu0 0.0
  %173 = vmatpush2.msra.mxu0 %v62
  %174 = vmatprep.subr.mxu0 0.0
  %175 = vmatpush2.msra.mxu0 %v61
  %176 = vmatprep.subr.mxu0 0.0
  %177 = vmatpush2.msra.mxu0 %v60
  %178 = vmatprep.subr.mxu0 0.0
  %179 = vmatpush2.msra.mxu0 %v59
  %180 = vmatprep.subr.mxu0 0.0
  %181 = vmatpush2.msra.mxu0 %v58
  %182 = vmatprep.subr.mxu0 0.0
  %183 = vmatpush2.msra.mxu0 %v57
  %184 = vmatprep.subr.mxu0 0.0
  %185 = vmatpush2.msra.mxu0 %v56
  %186 = vmatprep.subr.mxu0 0.0
  %187 = vmatpush2.msra.mxu0 %v55
  %188 = vmatprep.subr.mxu0 0.0
  %189 = vmatpush2.msra.mxu0 %v54
  %190 = vmatprep.subr.mxu0 0.0
  %191 = vmatpush2.msra.mxu0 %v53
  %192 = vmatprep.subr.mxu0 0.0
  %193 = vmatpush2.msra.mxu0 %v52
  %194 = vmatprep.subr.mxu0 0.0
  %195 = vmatpush2.msra.mxu0 %v51
  %196 = vmatprep.subr.mxu0 0.0
  %197 = vmatpush2.msra.mxu0 %v50
  %198 = vmatprep.subr.mxu0 0.0
  %199 = vmatpush2.msra.mxu0 %v49
  %200 = vmatprep.subr.mxu0 0.0
  %201 = vmatpush2.msra.mxu0 %v48
  %202 = vmatprep.mubr.f32.mxu0 %v27
  %203 = vmatmul.mubr.f32.gmra.mxu0 %v26
  %v204 = vpop.f32.mrf.mxu0
  %v205 = vadd.f32 %v128, %v204
  %v206 = vpop.f32.mrf.mxu0
  %207 = vdwg.mxu0
  %208 = vmatprep.subr.mxu0 0.0
  %209 = vmatpush1.msra.mxu0 %v79
  %210 = vmatprep.subr.mxu0 0.0
  %211 = vmatpush1.msra.mxu0 %v78
  %212 = vmatprep.subr.mxu0 0.0
  %213 = vmatpush1.msra.mxu0 %v77
  %214 = vmatprep.subr.mxu0 0.0
  %215 = vmatpush1.msra.mxu0 %v76
  %216 = vmatprep.subr.mxu0 0.0
  %217 = vmatpush1.msra.mxu0 %v75
  %218 = vmatprep.subr.mxu0 0.0
  %219 = vmatpush1.msra.mxu0 %v74
  %220 = vmatprep.subr.mxu0 0.0
  %221 = vmatpush1.msra.mxu0 %v73
  %222 = vmatprep.subr.mxu0 0.0
  %223 = vmatpush1.msra.mxu0 %v72
  %224 = vmatprep.subr.mxu0 0.0
  %225 = vmatpush1.msra.mxu0 %v71
  %226 = vmatprep.subr.mxu0 0.0
  %227 = vmatpush1.msra.mxu0 %v70
  %228 = vmatprep.subr.mxu0 0.0
  %229 = vmatpush1.msra.mxu0 %v69
  %230 = vmatprep.subr.mxu0 0.0
  %231 = vmatpush1.msra.mxu0 %v68
  %232 = vmatprep.subr.mxu0 0.0
  %233 = vmatpush1.msra.mxu0 %v67
  %234 = vmatprep.subr.mxu0 0.0
  %235 = vmatpush1.msra.mxu0 %v66
  %236 = vmatprep.subr.mxu0 0.0
  %237 = vmatpush1.msra.mxu0 %v65
  %238 = vmatprep.subr.mxu0 0.0
  %239 = vmatpush1.msra.mxu0 %v64
  %240 = vmatprep.subr.mxu0 0.0
  %241 = vmatpush2.msra.mxu0 %v95
  %242 = vmatprep.subr.mxu0 0.0
  %243 = vmatpush2.msra.mxu0 %v94
  %244 = vmatprep.subr.mxu0 0.0
  %245 = vmatpush2.msra.mxu0 %v93
  %246 = vmatprep.subr.mxu0 0.0
  %247 = vmatpush2.msra.mxu0 %v92
  %248 = vmatprep.subr.mxu0 0.0
  %249 = vmatpush2.msra.mxu0 %v91
  %250 = vmatprep.subr.mxu0 0.0
  %251 = vmatpush2.msra.mxu0 %v90
  %252 = vmatprep.subr.mxu0 0.0
  %253 = vmatpush2.msra.mxu0 %v89
  %254 = vmatprep.subr.mxu0 0.0
  %255 = vmatpush2.msra.mxu0 %v88
  %256 = vmatprep.subr.mxu0 0.0
  %257 = vmatpush2.msra.mxu0 %v87
  %258 = vmatprep.subr.mxu0 0.0
  %259 = vmatpush2.msra.mxu0 %v86
  %260 = vmatprep.subr.mxu0 0.0
  %261 = vmatpush2.msra.mxu0 %v85
  %262 = vmatprep.subr.mxu0 0.0
  %263 = vmatpush2.msra.mxu0 %v84
  %264 = vmatprep.subr.mxu0 0.0
  %265 = vmatpush2.msra.mxu0 %v83
  %266 = vmatprep.subr.mxu0 0.0
  %267 = vmatpush2.msra.mxu0 %v82
  %268 = vmatprep.subr.mxu0 0.0
  %269 = vmatpush2.msra.mxu0 %v81
  %270 = vmatprep.subr.mxu0 0.0
  %271 = vmatpush2.msra.mxu0 %v80
  %272 = vmatprep.mubr.f32.mxu0 %v29
  %273 = vmatmul.mubr.f32.gmra.mxu0 %v28
  %v274 = vpop.f32.mrf.mxu0
  %v275 = vadd.f32 %v205, %v274
  %v276 = vpop.f32.mrf.mxu0
  %277 = vdwg.mxu0
  %278 = vmatprep.subr.mxu0 0.0
  %279 = vmatpush1.msra.mxu0 %v111
  %280 = vmatprep.subr.mxu0 0.0
  %281 = vmatpush1.msra.mxu0 %v110
  %282 = vmatprep.subr.mxu0 0.0
  %283 = vmatpush1.msra.mxu0 %v109
  %284 = vmatprep.subr.mxu0 0.0
  %285 = vmatpush1.msra.mxu0 %v108
  %286 = vmatprep.subr.mxu0 0.0
  %287 = vmatpush1.msra.mxu0 %v107
  %288 = vmatprep.subr.mxu0 0.0
  %289 = vmatpush1.msra.mxu0 %v106
  %290 = vmatprep.subr.mxu0 0.0
  %291 = vmatpush1.msra.mxu0 %v105
  %292 = vmatprep.subr.mxu0 0.0
  %293 = vmatpush1.msra.mxu0 %v104
  %294 = vmatprep.subr.mxu0 0.0
  %295 = vmatpush1.msra.mxu0 %v103
  %296 = vmatprep.subr.mxu0 0.0
  %297 = vmatpush1.msra.mxu0 %v102
  %298 = vmatprep.subr.mxu0 0.0
  %299 = vmatpush1.msra.mxu0 %v101
  %300 = vmatprep.subr.mxu0 0.0
  %301 = vmatpush1.msra.mxu0 %v100
  %302 = vmatprep.subr.mxu0 0.0
  %303 = vmatpush1.msra.mxu0 %v99
  %304 = vmatprep.subr.mxu0 0.0
  %305 = vmatpush1.msra.mxu0 %v98
  %306 = vmatprep.subr.mxu0 0.0
  %307 = vmatpush1.msra.mxu0 %v97
  %308 = vmatprep.subr.mxu0 0.0
  %309 = vmatpush1.msra.mxu0 %v96
  %310 = vmatprep.subr.mxu0 0.0
  %311 = vmatpush2.msra.mxu0 0.0
  %312 = vmatprep.subr.mxu0 0.0
  %313 = vmatpush2.msra.mxu0 0.0
  %314 = vmatprep.subr.mxu0 0.0
  %315 = vmatpush2.msra.mxu0 0.0
  %316 = vmatprep.subr.mxu0 0.0
  %317 = vmatpush2.msra.mxu0 0.0
  %318 = vmatprep.subr.mxu0 0.0
  %319 = vmatpush2.msra.mxu0 0.0
  %320 = vmatprep.subr.mxu0 0.0
  %321 = vmatpush2.msra.mxu0 %v136
  %322 = vmatprep.subr.mxu0 0.0
  %323 = vmatpush2.msra.mxu0 %v121
  %324 = vmatprep.subr.mxu0 0.0
  %325 = vmatpush2.msra.mxu0 %v120
  %326 = vmatprep.subr.mxu0 0.0
  %327 = vmatpush2.msra.mxu0 %v119
  %328 = vmatprep.subr.mxu0 0.0
  %329 = vmatpush2.msra.mxu0 %v118
  %330 = vmatprep.subr.mxu0 0.0
  %331 = vmatpush2.msra.mxu0 %v117
  %332 = vmatprep.subr.mxu0 0.0
  %333 = vmatpush2.msra.mxu0 %v116
  %334 = vmatprep.subr.mxu0 0.0
  %335 = vmatpush2.msra.mxu0 %v115
  %336 = vmatprep.subr.mxu0 0.0
  %337 = vmatpush2.msra.mxu0 %v114
  %338 = vmatprep.subr.mxu0 0.0
  %339 = vmatpush2.msra.mxu0 %v113
  %340 = vmatprep.subr.mxu0 0.0
  %341 = vmatpush2.msra.mxu0 %v112
  %342 = vmatprep.mubr.f32.mxu0 %v132
  %343 = vmatmul.mubr.f32.gmra.mxu0 %v30
  %v344 = vpop.f32.mrf.mxu0
  %v345 = vadd.f32 %v275, %v344
  %v346 = vpop.f32.mrf.mxu0
  %347 = vdwg.mxu0
  %v348 = vmax.f32 %v345, 0.0
  %v349 = vld [vmem:[%s3] sm:$0xff]
  %v350 = vld [vmem:[%s3 + $0x8] sm:$0xff]
  %v351 = vld [vmem:[%s3 + $0x10] sm:$0xff]
  %v352 = vld [vmem:[%s3 + $0x18] sm:$0xff]
  %v353 = vld [vmem:[%s3 + $0x20] sm:$0xff]
  %v354 = vld [vmem:[%s3 + $0x28] sm:$0xff]
  %v355 = vld [vmem:[%s3 + $0x30] sm:$0xff]
  %v356 = vld [vmem:[%s3 + $0x38] sm:$0xff]
  %v357 = vld [vmem:[%s4] sm:$0x1]
  %v359 = vlaneseq
  %v360 = vshrl.u32 %v359, 7
  %v361 = vsub.s32 0, %v360
  %v362 = vrot.slane %v357, %v361
  %vm364 = vcmask 523264
  %v366 = vsel %vm364, %v348, 0
  %368 = vmatprep.subr.mxu0 0.0
  %369 = vmatpush1.msra.mxu0 0.0
  %370 = vmatprep.subr.mxu0 0.0
  %371 = vmatpush1.msra.mxu0 0.0
  %372 = vmatprep.subr.mxu0 0.0
  %373 = vmatpush1.msra.mxu0 0.0
  %374 = vmatprep.subr.mxu0 0.0
  %375 = vmatpush1.msra.mxu0 0.0
  %376 = vmatprep.subr.mxu0 0.0
  %377 = vmatpush1.msra.mxu0 0.0
  %378 = vmatprep.subr.mxu0 0.0
  %379 = vmatpush1.msra.mxu0 0.0
  %380 = vmatprep.subr.mxu0 0.0
  %381 = vmatpush1.msra.mxu0 0.0
  %382 = vmatprep.subr.mxu0 0.0
  %383 = vmatpush1.msra.mxu0 0.0
  %384 = vmatprep.subr.mxu0 0.0
  %385 = vmatpush1.msra.mxu0 %v356
  %386 = vmatprep.subr.mxu0 0.0
  %387 = vmatpush1.msra.mxu0 %v355
  %388 = vmatprep.subr.mxu0 0.0
  %389 = vmatpush1.msra.mxu0 %v354
  %390 = vmatprep.subr.mxu0 0.0
  %391 = vmatpush1.msra.mxu0 %v353
  %392 = vmatprep.subr.mxu0 0.0
  %393 = vmatpush1.msra.mxu0 %v352
  %394 = vmatprep.subr.mxu0 0.0
  %395 = vmatpush1.msra.mxu0 %v351
  %396 = vmatprep.subr.mxu0 0.0
  %397 = vmatpush1.msra.mxu0 %v350
  %398 = vmatprep.subr.mxu0 0.0
  %399 = vmatpush1.msra.mxu0 %v349
  %400 = vmatprep.subr.mxu0 0.0
  %401 = vmatpush2.msra.mxu0 0.0
  %402 = vmatprep.subr.mxu0 0.0
  %403 = vmatpush2.msra.mxu0 0.0
  %404 = vmatprep.subr.mxu0 0.0
  %405 = vmatpush2.msra.mxu0 0.0
  %406 = vmatprep.subr.mxu0 0.0
  %407 = vmatpush2.msra.mxu0 0.0
  %408 = vmatprep.subr.mxu0 0.0
  %409 = vmatpush2.msra.mxu0 0.0
  %410 = vmatprep.subr.mxu0 0.0
  %411 = vmatpush2.msra.mxu0 0.0
  %412 = vmatprep.subr.mxu0 0.0
  %413 = vmatpush2.msra.mxu0 0.0
  %414 = vmatprep.subr.mxu0 0.0
  %415 = vmatpush2.msra.mxu0 0.0
  %416 = vmatprep.subr.mxu0 0.0
  %417 = vmatpush2.msra.mxu0 0.0
  %418 = vmatprep.subr.mxu0 0.0
  %419 = vmatpush2.msra.mxu0 0.0
  %420 = vmatprep.subr.mxu0 0.0
  %421 = vmatpush2.msra.mxu0 0.0
  %422 = vmatprep.subr.mxu0 0.0
  %423 = vmatpush2.msra.mxu0 0.0
  %424 = vmatprep.subr.mxu0 0.0
  %425 = vmatpush2.msra.mxu0 0.0
  %426 = vmatprep.subr.mxu0 0.0
  %427 = vmatpush2.msra.mxu0 0.0
  %428 = vmatprep.subr.mxu0 0.0
  %429 = vmatpush2.msra.mxu0 0.0
  %430 = vmatprep.subr.mxu0 0.0
  %431 = vmatpush2.msra.mxu0 0.0
  %432 = vmatprep.mubr.f32.mxu0 0.0
  %433 = vmatmul.mubr.f32.gmra.mxu0 %v366
  %v434 = vpop.f32.mrf.mxu0
  %v435 = vadd.f32 %v362, %v434
  %v436 = vpop.f32.mrf.mxu0
  %437 = vdwg.mxu0
  %v438 = vmax.f32 %v435, 0.0
  %v439 = vld [vmem:[%s5] sm:$0xff]
  %v440 = vld [vmem:[%s5 + $0x8] sm:$0x7]
  %v441 = vld [vmem:[%s6] sm:$0x1]
  %v443 = vlaneseq
  %v444 = vshrl.u32 %v443, 7
  %v445 = vsub.s32 0, %v444
  %v446 = vrot.slane %v441, %v445
  %vm448 = vcmask 89088
  %v450 = vsel %vm448, %v438, 0
  %vm452 = vcmask 1042432
  %v454 = vsel %vm452, %v440, 0
  %456 = vmatprep.subr.mxu0 0.0
  %457 = vmatpush1.msra.mxu0 0.0
  %458 = vmatprep.subr.mxu0 0.0
  %459 = vmatpush1.msra.mxu0 0.0
  %460 = vmatprep.subr.mxu0 0.0
  %461 = vmatpush1.msra.mxu0 0.0
  %462 = vmatprep.subr.mxu0 0.0
  %463 = vmatpush1.msra.mxu0 0.0
  %464 = vmatprep.subr.mxu0 0.0
  %465 = vmatpush1.msra.mxu0 0.0
  %466 = vmatprep.subr.mxu0 0.0
  %467 = vmatpush1.msra.mxu0 0.0
  %468 = vmatprep.subr.mxu0 0.0
  %469 = vmatpush1.msra.mxu0 0.0
  %470 = vmatprep.subr.mxu0 0.0
  %471 = vmatpush1.msra.mxu0 0.0
  %472 = vmatprep.subr.mxu0 0.0
  %473 = vmatpush1.msra.mxu0 0.0
  %474 = vmatprep.subr.mxu0 0.0
  %475 = vmatpush1.msra.mxu0 0.0
  %476 = vmatprep.subr.mxu0 0.0
  %477 = vmatpush1.msra.mxu0 0.0
  %478 = vmatprep.subr.mxu0 0.0
  %479 = vmatpush1.msra.mxu0 0.0
  %480 = vmatprep.subr.mxu0 0.0
  %481 = vmatpush1.msra.mxu0 0.0
  %482 = vmatprep.subr.mxu0 0.0
  %483 = vmatpush1.msra.mxu0 0.0
  %484 = vmatprep.subr.mxu0 0.0
  %485 = vmatpush1.msra.mxu0 %v454
  %486 = vmatprep.subr.mxu0 0.0
  %487 = vmatpush1.msra.mxu0 %v439
  %488 = vmatprep.subr.mxu0 0.0
  %489 = vmatpush2.msra.mxu0 0.0
  %490 = vmatprep.subr.mxu0 0.0
  %491 = vmatpush2.msra.mxu0 0.0
  %492 = vmatprep.subr.mxu0 0.0
  %493 = vmatpush2.msra.mxu0 0.0
  %494 = vmatprep.subr.mxu0 0.0
  %495 = vmatpush2.msra.mxu0 0.0
  %496 = vmatprep.subr.mxu0 0.0
  %497 = vmatpush2.msra.mxu0 0.0
  %498 = vmatprep.subr.mxu0 0.0
  %499 = vmatpush2.msra.mxu0 0.0
  %500 = vmatprep.subr.mxu0 0.0
  %501 = vmatpush2.msra.mxu0 0.0
  %502 = vmatprep.subr.mxu0 0.0
  %503 = vmatpush2.msra.mxu0 0.0
  %504 = vmatprep.subr.mxu0 0.0
  %505 = vmatpush2.msra.mxu0 0.0
  %506 = vmatprep.subr.mxu0 0.0
  %507 = vmatpush2.msra.mxu0 0.0
  %508 = vmatprep.subr.mxu0 0.0
  %509 = vmatpush2.msra.mxu0 0.0
  %510 = vmatprep.subr.mxu0 0.0
  %511 = vmatpush2.msra.mxu0 0.0
  %512 = vmatprep.subr.mxu0 0.0
  %513 = vmatpush2.msra.mxu0 0.0
  %514 = vmatprep.subr.mxu0 0.0
  %515 = vmatpush2.msra.mxu0 0.0
  %516 = vmatprep.subr.mxu0 0.0
  %517 = vmatpush2.msra.mxu0 0.0
  %518 = vmatprep.subr.mxu0 0.0
  %519 = vmatpush2.msra.mxu0 0.0
  %520 = vmatprep.mubr.f32.mxu0 0.0
  %521 = vmatmul.mubr.f32.gmra.mxu0 %v450
  %v522 = vpop.f32.mrf.mxu0
  %v523 = vadd.f32 %v446, %v522
  %v524 = vpop.f32.mrf.mxu0
  %525 = vdwg.mxu0
  %vm526 = vcmask 31744
  %527 = vst.msk [vmem:[%s7] sm:$0xff] %vm526, %v523
  // Predicated region
  $region30: #{nn_model_1o_forward.1} parent=0 // pred_check
    _
  $region31: #{nn_model_1o_forward.1} parent=0 // pred_check_branch
    %529 = sbr.rel (0) target = $region33
  $region32: #{nn_model_1o_forward.1} parent=0 // pred_region
    _
  $region33: #{nn_model_1o_forward.1} parent=0 // pred_fallthru
    _
  // Predicated region
  $region34: #{nn_model_1o_forward.1} parent=0 // pred_check
    _
  $region35: #{nn_model_1o_forward.1} parent=0 // pred_check_branch
    %531 = sbr.rel (0) target = $region37
  $region36: #{nn_model_1o_forward.1} parent=0 // pred_region
    _
  $region37: #{nn_model_1o_forward.1} parent=0 // pred_fallthru
    _

</llo_original>
